<compile_context>
chip_gen: v7x
topology: tpu7x:2x2x1
jax: 0.10.0
libtpu: 0.0.40
codegen_flags: <defaults>
</compile_context>

<pallas_src>
import jax
import jax.numpy as jnp
from jax.experimental import pallas as pl
from jax.experimental.pallas import tpu as pltpu


def _round_up(n: int, m: int) -> int:
    return ((n + m - 1) // m) * m


def mlp_kernel(x_ref, w1_ref, b1_ref, w2_ref, b2_ref, o_ref):
    # hidden = relu(x @ W1 + b1)   (f32 accumulate, fused bias + ReLU)
    h = jnp.dot(x_ref[...], w1_ref[...], preferred_element_type=jnp.float32)
    h = jnp.maximum(h + b1_ref[...], 0.0)          # (1, Hp) broadcasts over TM
    # out = hidden @ W2 + b2
    y = jnp.dot(h, w2_ref[...], preferred_element_type=jnp.float32)
    o_ref[...] = (y + b2_ref[...]).astype(o_ref.dtype)


def net_forward(x, w1, b1, w2, b2):
    """Pallas implementation of Net.forward with lane-dense padded tiles."""
    B, F = x.shape
    H = w1.shape[1]
    O = w2.shape[1]

    # Lane-dense padding: last dims -> multiples of 128 (zero-pad is exact:
    # padded hidden units have bias 0 -> relu(0)=0 -> hit zero rows of W2).
    H_pad = _round_up(H, 128)
    O_pad = _round_up(O, 128)

    # Batch tile: sublane-aligned (multiple of 8); capped at 256 so large
    # batches feed full MXU M-passes while small ones use a single tile.
    TM = min(256, _round_up(B, 8))
    B_pad = _round_up(B, TM)

    x_p = jnp.pad(x, ((0, B_pad - B), (0, 0)))
    w1_p = jnp.pad(w1, ((0, 0), (0, H_pad - H)))
    b1_p = jnp.pad(b1, (0, H_pad - H)).reshape(1, H_pad)
    w2_p = jnp.pad(w2, ((0, H_pad - H), (0, O_pad - O)))
    b2_p = jnp.pad(b2, (0, O_pad - O)).reshape(1, O_pad)

    out_p = pl.pallas_call(
        mlp_kernel,
        out_shape=jax.ShapeDtypeStruct((B_pad, O_pad), jnp.float32),
        grid_spec=pltpu.PrefetchScalarGridSpec(
            num_scalar_prefetch=0,
            grid=(B_pad // TM,),
            in_specs=[
                pl.BlockSpec((TM, F), lambda i: (i, 0)),         # batch-tiled x
                pl.BlockSpec((F, H_pad), lambda i: (0, 0)),      # VMEM-resident W1
                pl.BlockSpec((1, H_pad), lambda i: (0, 0)),      # VMEM-resident b1
                pl.BlockSpec((H_pad, O_pad), lambda i: (0, 0)),  # VMEM-resident W2
                pl.BlockSpec((1, O_pad), lambda i: (0, 0)),      # VMEM-resident b2
            ],
            out_specs=pl.BlockSpec((TM, O_pad), lambda i: (i, 0)),
        ),
        compiler_params=pltpu.CompilerParams(
            dimension_semantics=("parallel",),  # independent batch tiles (megacore)
        ),
    )(x_p, w1_p, b1_p, w2_p, b2_p)

    return out_p[:B, :O]


def init_params(key, n_feature, n_hidden, n_output):
    """Deterministic init matching torch.nn.Linear shapes.

    torch Linear stores weight as (out, in); we keep the transposed
    (in, out) layout for the kernel (mathematically identical forward).
    """
    k1, k2, k3, k4 = jax.random.split(key, 4)
    lim1 = 1.0 / jnp.sqrt(n_feature)
    lim2 = 1.0 / jnp.sqrt(n_hidden)
    w1 = jax.random.uniform(k1, (n_feature, n_hidden), jnp.float32, -lim1, lim1)
    b1 = jax.random.uniform(k2, (n_hidden,), jnp.float32, -lim1, lim1)
    w2 = jax.random.uniform(k3, (n_hidden, n_output), jnp.float32, -lim2, lim2)
    b2 = jax.random.uniform(k4, (n_output,), jnp.float32, -lim2, lim2)
    return w1, b1, w2, b2


if __name__ == "__main__":
    key = jax.random.PRNGKey(0)
    k_data, k_param = jax.random.split(key)

    # Mirror the reference data construction (small scale):
    # x0 ~ N(+2, 1), x1 ~ N(-2, 1), concatenated along batch.
    n_per_class, n_feature, n_hidden, n_output = 8, 2, 32, 2
    kd0, kd1 = jax.random.split(k_data)
    x0 = 2.0 + jax.random.normal(kd0, (n_per_class, n_feature), jnp.float32)
    x1 = -2.0 + jax.random.normal(kd1, (n_per_class, n_feature), jnp.float32)
    x = jnp.concatenate([x0, x1], axis=0)          # (16, 2) float32

    w1, b1, w2, b2 = init_params(k_param, n_feature, n_hidden, n_output)

    out = net_forward(x, w1, b1, w2, b2)
    out = jax.block_until_ready(out)

    # Pure-JAX reference check (un-padded math)
    ref = jnp.maximum(x @ w1 + b1, 0.0) @ w2 + b2
    assert out.shape == (2 * n_per_class, n_output)
    assert jnp.allclose(out, ref, atol=1e-5, rtol=1e-5)

    print("KERNEL_OK")
</pallas_src>

<mosaic_0001>
module attributes {stable_mosaic.version = 11 : i64} {
  func.func @mlp_kernel(%arg0: i32, %arg1: memref<16x2xf32, #tpu.memory_space<vmem>>, %arg2: memref<2x128xf32, #tpu.memory_space<vmem>>, %arg3: memref<1x128xf32, #tpu.memory_space<vmem>>, %arg4: memref<128x128xf32, #tpu.memory_space<vmem>>, %arg5: memref<1x128xf32, #tpu.memory_space<vmem>>, %arg6: memref<16x128xf32, #tpu.memory_space<vmem>>) attributes {dimension_semantics = [#tpu.dimension_semantics<parallel>], iteration_bounds = array<i64: 1>, scalar_prefetch = 0 : i64, scratch_operands = 0 : i64, tpu.core_type = #tpu.core_type<tc>, window_params = [{transform_indices = @transform_0, window_bounds = array<i64: 16, 2>}, {pipeline_mode = #tpu.pipeline_mode<synchronous>, transform_indices = @transform_1, window_bounds = array<i64: 2, 128>}, {pipeline_mode = #tpu.pipeline_mode<synchronous>, transform_indices = @transform_2, window_bounds = array<i64: 1, 128>}, {pipeline_mode = #tpu.pipeline_mode<synchronous>, transform_indices = @transform_3, window_bounds = array<i64: 128, 128>}, {pipeline_mode = #tpu.pipeline_mode<synchronous>, transform_indices = @transform_4, window_bounds = array<i64: 1, 128>}, {transform_indices = @transform_5, window_bounds = array<i64: 16, 128>}]} {
    %c0 = arith.constant 0 : index
    %c0_0 = arith.constant 0 : index
    %0 = vector.load %arg1[%c0, %c0_0] : memref<16x2xf32, #tpu.memory_space<vmem>>, vector<16x2xf32>
    %c0_1 = arith.constant 0 : index
    %c0_2 = arith.constant 0 : index
    %1 = vector.load %arg2[%c0_1, %c0_2] : memref<2x128xf32, #tpu.memory_space<vmem>>, vector<2x128xf32>
    %cst = arith.constant dense<0.000000e+00> : vector<16x128xf32>
    %2 = tpu.matmul %0, %1, %cst {dimension_numbers = #tpu.dot_dimension_numbers<[1], [0], [0], [1], [0, 0, 1, 1], [], []>} : vector<16x2xf32>, vector<2x128xf32>, vector<16x128xf32> -> vector<16x128xf32>
    %c0_3 = arith.constant 0 : index
    %c0_4 = arith.constant 0 : index
    %3 = vector.load %arg3[%c0_3, %c0_4] : memref<1x128xf32, #tpu.memory_space<vmem>>, vector<1x128xf32>
    %4 = vector.broadcast %3 : vector<1x128xf32> to vector<16x128xf32>
    %5 = arith.addf %2, %4 : vector<16x128xf32>
    %cst_5 = arith.constant 0.000000e+00 : f32
    %6 = vector.broadcast %cst_5 : f32 to vector<16x128xf32>
    %7 = arith.maximumf %5, %6 : vector<16x128xf32>
    %c0_6 = arith.constant 0 : index
    %c0_7 = arith.constant 0 : index
    %8 = vector.load %arg4[%c0_6, %c0_7] : memref<128x128xf32, #tpu.memory_space<vmem>>, vector<128x128xf32>
    %cst_8 = arith.constant dense<0.000000e+00> : vector<16x128xf32>
    %9 = tpu.matmul %7, %8, %cst_8 {dimension_numbers = #tpu.dot_dimension_numbers<[1], [0], [0], [1], [0, 0, 1, 1], [], []>} : vector<16x128xf32>, vector<128x128xf32>, vector<16x128xf32> -> vector<16x128xf32>
    %c0_9 = arith.constant 0 : index
    %c0_10 = arith.constant 0 : index
    %10 = vector.load %arg5[%c0_9, %c0_10] : memref<1x128xf32, #tpu.memory_space<vmem>>, vector<1x128xf32>
    %11 = vector.broadcast %10 : vector<1x128xf32> to vector<16x128xf32>
    %12 = arith.addf %9, %11 : vector<16x128xf32>
    %c0_11 = arith.constant 0 : index
    %c0_12 = arith.constant 0 : index
    %13 = vector.load %arg6[%c0_11, %c0_12] : memref<16x128xf32, #tpu.memory_space<vmem>>, vector<16x128xf32>
    tpu.vector_store %arg6[%c0_11, %c0_12], %12 {strides = array<i32>} : memref<16x128xf32, #tpu.memory_space<vmem>>, vector<16x128xf32>,
    return
  }
  func.func @transform_0(%arg0: i32) -> (i32, i32) {
    %c0_i32 = arith.constant 0 : i32
    %c0_i32_0 = arith.constant 0 : i32
    return %arg0, %c0_i32 : i32, i32
  }
  func.func @transform_1(%arg0: i32) -> (i32, i32) {
    %c0_i32 = arith.constant 0 : i32
    %c0_i32_0 = arith.constant 0 : i32
    %c0_i32_1 = arith.constant 0 : i32
    return %c0_i32, %c0_i32_0 : i32, i32
  }
  func.func @transform_2(%arg0: i32) -> (i32, i32) {
    %c0_i32 = arith.constant 0 : i32
    %c0_i32_0 = arith.constant 0 : i32
    %c0_i32_1 = arith.constant 0 : i32
    return %c0_i32, %c0_i32_0 : i32, i32
  }
  func.func @transform_3(%arg0: i32) -> (i32, i32) {
    %c0_i32 = arith.constant 0 : i32
    %c0_i32_0 = arith.constant 0 : i32
    %c0_i32_1 = arith.constant 0 : i32
    return %c0_i32, %c0_i32_0 : i32, i32
  }
  func.func @transform_4(%arg0: i32) -> (i32, i32) {
    %c0_i32 = arith.constant 0 : i32
    %c0_i32_0 = arith.constant 0 : i32
    %c0_i32_1 = arith.constant 0 : i32
    return %c0_i32, %c0_i32_0 : i32, i32
  }
  func.func @transform_5(%arg0: i32) -> (i32, i32) {
    %c0_i32 = arith.constant 0 : i32
    %c0_i32_0 = arith.constant 0 : i32
    return %arg0, %c0_i32 : i32, i32
  }
}

</mosaic_0001>

<llo_original>
// kernel: tpu_custom_call.1
$region0: #{tpu_custom_call.1}
  #allocation0 [shape = 'u32[]', space=smem, size = 0x4, offset = 0x4, fixed_abs, tag = 'smem constant byte address 0x4 - core index']
  #allocation1 [shape = 'u32[144,128]{1,0:T(1,128)}', space=vmem, size = 0x12000, scoped, tag = 'internal scratch']
  %s0 = inlined_call_operand.vmem [shape: f32[16,2], index: 0, kind: input, shape index: {}]
  %s1 = inlined_call_operand.vmem [shape: f32[2,128], index: 1, kind: input, shape index: {}]
  %s2 = inlined_call_operand.vmem [shape: f32[1,128], index: 2, kind: input, shape index: {}]
  %s3 = inlined_call_operand.hbm [shape: f32[128,128], index: 3, kind: input, shape index: {}]
  %s4 = inlined_call_operand.vmem [shape: f32[1,128], index: 4, kind: input, shape index: {}]
  %s5 = inlined_call_operand.hbm [shape: f32[16,128], index: 5, kind: output, shape index: {}]
  %s6 = sld [smem:[#allocation0]]
  $region34: #{tpu_custom_call.1} parent=0
    _
  %s8 = ssub.s32 1, %s6
  %s9 = scalar_select 0, %s8, %s6
  $region1: #{tpu_custom_call.1} parent=0
    #allocation2 [shape = 'u8[65536]{0}', space=vmem, size = 0x10000, scoped, tag = 'input window, operand 3, single buffered']
    #allocation3 [shape = 's32[1]{0}', space=sflag, size = 0x4, scoped, tag = 'scoped memory for tpu_custom_call.1']
    #allocation4 [shape = 's32[1]{0}', space=sflag, size = 0x4, scoped, tag = 'scoped memory for tpu_custom_call.1']
    #allocation5 [shape = 'u8[8192]{0}', space=vmem, size = 0x2000, scoped, tag = 'output window, operand 0, single buffered']
    %10 = vsyncpa [#allocation3], 0
    %11 = vsyncpa [#allocation4], 0
    // Predicated region
    $region2: #{tpu_custom_call.1} parent=1 // pred_check
      _
    $region3: #{tpu_custom_call.1} parent=1 // pred_check_branch
      %13 = sbr.rel (0) target = $region5
    $region4: #{tpu_custom_call.1} parent=1 // pred_region
      _
    $region5: #{tpu_custom_call.1} parent=1 // pred_fallthru
      _
    // Predicated region
    $region6: #{tpu_custom_call.1} parent=1 // pred_check
      _
    $region7: #{tpu_custom_call.1} parent=1 // pred_check_branch
      %15 = sbr.rel (0) target = $region9
    $region8: #{tpu_custom_call.1} parent=1 // pred_region
      _
    $region9: #{tpu_custom_call.1} parent=1 // pred_fallthru
      _
    // Predicated region
    $region10: #{tpu_custom_call.1} parent=1 // pred_check
      _
    $region11: #{tpu_custom_call.1} parent=1 // pred_check_branch
      %17 = sbr.rel (0) target = $region13
    $region12: #{tpu_custom_call.1} parent=1 // pred_region
      _
    $region13: #{tpu_custom_call.1} parent=1 // pred_fallthru
      _
    // Predicated region
    $region14: #{tpu_custom_call.1} parent=1 // pred_check
      _
    $region15: #{tpu_custom_call.1} parent=1 // pred_check_branch
      %19 = sbr.rel (0) target = $region17
    $region16: #{tpu_custom_call.1} parent=1 // pred_region
      %s21 = ssub.s32 2048, 2048
      %22 = vsyncadd [#allocation3], %s21
      %s23 = sshll.u32 [#allocation2], 4
      %s24 = int_to_ptr.vmem [resolvable:$true] %s23
      %29 = dma.hbm_to_vmem [thread:$0]  %s3, 2048, %s24, [#allocation3], 128, 128, 8
    $region17: #{tpu_custom_call.1} parent=1 // pred_fallthru
      _
    // Predicated region
    $region18: #{tpu_custom_call.1} parent=1 // pred_check
      _
    $region19: #{tpu_custom_call.1} parent=1 // pred_check_branch
      %31 = sbr.rel (0) target = $region21
    $region20: #{tpu_custom_call.1} parent=1 // pred_region
      _
    $region21: #{tpu_custom_call.1} parent=1 // pred_fallthru
      _
    // Predicated region
    $region22: #{tpu_custom_call.1} parent=1 // pred_check
      _
    $region23: #{tpu_custom_call.1} parent=1 // pred_check_branch
      %33 = sbr.rel (0) target = $region25
    $region24: #{tpu_custom_call.1} parent=1 // pred_region
      %34 = dma.done [#allocation3], 2048
    $region25: #{tpu_custom_call.1} parent=1 // pred_fallthru
      _
    %v35 = vld [vmem:[%s0] sm:$0xff]
    %v36 = vld [vmem:[%s0 + $0x8] sm:$0xff]
    %v37 = vld [vmem:[%s1] sm:$0x3]
    %v38 = vld [vmem:[%s2] sm:$0x1]
    %v40 = vlaneseq
    %v41 = vshrl.u32 %v40, 7
    %v42 = vsub.s32 0, %v41
    %v43 = vrot.slane %v38, %v42
    %vm45 = vcmask 15360
    %v47 = vsel %vm45, %v35, 0
    %v50 = vsel %vm45, %v36, 0
    %vm52 = vcmask 1041408
    %v54 = vsel %vm52, %v37, 0
    %56 = vmatprep.subr.mxu0 0.0
    %57 = vmatpush1.msra.mxu0 %v54
    %58 = vmatprep.subr.mxu0 0.0
    %59 = vmatpush1.msra.mxu0 0.0
    %60 = vmatprep.subr.mxu0 0.0
    %61 = vmatpush1.msra.mxu0 0.0
    %62 = vmatprep.subr.mxu0 0.0
    %63 = vmatpush1.msra.mxu0 0.0
    %64 = vmatprep.subr.mxu0 0.0
    %65 = vmatpush1.msra.mxu0 0.0
    %66 = vmatprep.subr.mxu0 0.0
    %67 = vmatpush1.msra.mxu0 0.0
    %68 = vmatprep.subr.mxu0 0.0
    %69 = vmatpush1.msra.mxu0 0.0
    %70 = vmatprep.subr.mxu0 0.0
    %71 = vmatpush1.msra.mxu0 0.0
    %72 = vmatprep.subr.mxu0 0.0
    %73 = vmatpush1.msra.mxu0 0.0
    %74 = vmatprep.subr.mxu0 0.0
    %75 = vmatpush1.msra.mxu0 0.0
    %76 = vmatprep.subr.mxu0 0.0
    %77 = vmatpush1.msra.mxu0 0.0
    %78 = vmatprep.subr.mxu0 0.0
    %79 = vmatpush1.msra.mxu0 0.0
    %80 = vmatprep.subr.mxu0 0.0
    %81 = vmatpush1.msra.mxu0 0.0
    %82 = vmatprep.subr.mxu0 0.0
    %83 = vmatpush1.msra.mxu0 0.0
    %84 = vmatprep.subr.mxu0 0.0
    %85 = vmatpush1.msra.mxu0 0.0
    %86 = vmatprep.subr.mxu0 0.0
    %87 = vmatpush1.msra.mxu0 0.0
    %88 = vmatprep.subr.mxu0 0.0
    %89 = vmatpush1.msra.mxu0 0.0
    %90 = vmatprep.subr.mxu0 0.0
    %91 = vmatpush1.msra.mxu0 0.0
    %92 = vmatprep.subr.mxu0 0.0
    %93 = vmatpush1.msra.mxu0 0.0
    %94 = vmatprep.subr.mxu0 0.0
    %95 = vmatpush1.msra.mxu0 0.0
    %96 = vmatprep.subr.mxu0 0.0
    %97 = vmatpush1.msra.mxu0 0.0
    %98 = vmatprep.subr.mxu0 0.0
    %99 = vmatpush1.msra.mxu0 0.0
    %100 = vmatprep.subr.mxu0 0.0
    %101 = vmatpush1.msra.mxu0 0.0
    %102 = vmatprep.subr.mxu0 0.0
    %103 = vmatpush1.msra.mxu0 0.0
    %104 = vmatprep.subr.mxu0 0.0
    %105 = vmatpush1.msra.mxu0 0.0
    %106 = vmatprep.subr.mxu0 0.0
    %107 = vmatpush1.msra.mxu0 0.0
    %108 = vmatprep.subr.mxu0 0.0
    %109 = vmatpush1.msra.mxu0 0.0
    %110 = vmatprep.subr.mxu0 0.0
    %111 = vmatpush1.msra.mxu0 0.0
    %112 = vmatprep.subr.mxu0 0.0
    %113 = vmatpush1.msra.mxu0 0.0
    %114 = vmatprep.subr.mxu0 0.0
    %115 = vmatpush1.msra.mxu0 0.0
    %116 = vmatprep.subr.mxu0 0.0
    %117 = vmatpush1.msra.mxu0 0.0
    %118 = vmatprep.subr.mxu0 0.0
    %119 = vmatpush1.msra.mxu0 0.0
    %120 = vmatprep.mubr.f32.mxu0 0.0
    %121 = vmatmul.mubr.f32.gmra.mrb[0].mxu0 %v47
    %v122 = vpop.f32.mrb[0].mxu0
    %v123 = vadd.f32 %v43, %v122
    %v124 = vpop.f32.mrb[0].mxu0
    %125 = vmatprep.mubr.f32.mxu0 0.0
    %126 = vmatmul.mubr.f32.gmra.mrb[0].mxu0 %v50
    %v127 = vpop.f32.mrb[0].mxu0
    %v128 = vadd.f32 %v43, %v127
    %v129 = vpop.f32.mrb[0].mxu0
    %130 = vdwg.mxu0
    %v131 = vmax.f32 %v123, 0.0
    %v132 = vmax.f32 %v128, 0.0
    %v133 = vld [vmem:[#allocation2] sm:$0xff]
    %v134 = vld [vmem:[#allocation2 + $0x8] sm:$0xff]
    %v135 = vld [vmem:[#allocation2 + $0x10] sm:$0xff]
    %v136 = vld [vmem:[#allocation2 + $0x18] sm:$0xff]
    %v137 = vld [vmem:[#allocation2 + $0x20] sm:$0xff]
    %v138 = vld [vmem:[#allocation2 + $0x28] sm:$0xff]
    %v139 = vld [vmem:[#allocation2 + $0x30] sm:$0xff]
    %v140 = vld [vmem:[#allocation2 + $0x38] sm:$0xff]
    %v141 = vld [vmem:[#allocation2 + $0x40] sm:$0xff]
    %v142 = vld [vmem:[#allocation2 + $0x48] sm:$0xff]
    %v143 = vld [vmem:[#allocation2 + $0x50] sm:$0xff]
    %v144 = vld [vmem:[#allocation2 + $0x58] sm:$0xff]
    %v145 = vld [vmem:[#allocation2 + $0x60] sm:$0xff]
    %v146 = vld [vmem:[#allocation2 + $0x68] sm:$0xff]
    %v147 = vld [vmem:[#allocation2 + $0x70] sm:$0xff]
    %v148 = vld [vmem:[#allocation2 + $0x78] sm:$0xff]
    %v149 = vld [vmem:[%s4] sm:$0x1]
    %v151 = vlaneseq
    %v152 = vshrl.u32 %v151, 7
    %v153 = vsub.s32 0, %v152
    %v154 = vrot.slane %v149, %v153
    %156 = vmatprep.subr.mxu0 0.0
    %157 = vmatpush1.msra.mxu0 %v133
    %158 = vmatprep.subr.mxu0 0.0
    %159 = vmatpush1.msra.mxu0 %v134
    %160 = vmatprep.subr.mxu0 0.0
    %161 = vmatpush1.msra.mxu0 %v135
    %162 = vmatprep.subr.mxu0 0.0
    %163 = vmatpush1.msra.mxu0 %v136
    %164 = vmatprep.subr.mxu0 0.0
    %165 = vmatpush1.msra.mxu0 %v137
    %166 = vmatprep.subr.mxu0 0.0
    %167 = vmatpush1.msra.mxu0 %v138
    %168 = vmatprep.subr.mxu0 0.0
    %169 = vmatpush1.msra.mxu0 %v139
    %170 = vmatprep.subr.mxu0 0.0
    %171 = vmatpush1.msra.mxu0 %v140
    %172 = vmatprep.subr.mxu0 0.0
    %173 = vmatpush1.msra.mxu0 %v141
    %174 = vmatprep.subr.mxu0 0.0
    %175 = vmatpush1.msra.mxu0 %v142
    %176 = vmatprep.subr.mxu0 0.0
    %177 = vmatpush1.msra.mxu0 %v143
    %178 = vmatprep.subr.mxu0 0.0
    %179 = vmatpush1.msra.mxu0 %v144
    %180 = vmatprep.subr.mxu0 0.0
    %181 = vmatpush1.msra.mxu0 %v145
    %182 = vmatprep.subr.mxu0 0.0
    %183 = vmatpush1.msra.mxu0 %v146
    %184 = vmatprep.subr.mxu0 0.0
    %185 = vmatpush1.msra.mxu0 %v147
    %186 = vmatprep.subr.mxu0 0.0
    %187 = vmatpush1.msra.mxu0 %v148
    %188 = vmatprep.subr.mxu0 0.0
    %189 = vmatpush1.msra.mxu0 0.0
    %190 = vmatprep.subr.mxu0 0.0
    %191 = vmatpush1.msra.mxu0 0.0
    %192 = vmatprep.subr.mxu0 0.0
    %193 = vmatpush1.msra.mxu0 0.0
    %194 = vmatprep.subr.mxu0 0.0
    %195 = vmatpush1.msra.mxu0 0.0
    %196 = vmatprep.subr.mxu0 0.0
    %197 = vmatpush1.msra.mxu0 0.0
    %198 = vmatprep.subr.mxu0 0.0
    %199 = vmatpush1.msra.mxu0 0.0
    %200 = vmatprep.subr.mxu0 0.0
    %201 = vmatpush1.msra.mxu0 0.0
    %202 = vmatprep.subr.mxu0 0.0
    %203 = vmatpush1.msra.mxu0 0.0
    %204 = vmatprep.subr.mxu0 0.0
    %205 = vmatpush1.msra.mxu0 0.0
    %206 = vmatprep.subr.mxu0 0.0
    %207 = vmatpush1.msra.mxu0 0.0
    %208 = vmatprep.subr.mxu0 0.0
    %209 = vmatpush1.msra.mxu0 0.0
    %210 = vmatprep.subr.mxu0 0.0
    %211 = vmatpush1.msra.mxu0 0.0
    %212 = vmatprep.subr.mxu0 0.0
    %213 = vmatpush1.msra.mxu0 0.0
    %214 = vmatprep.subr.mxu0 0.0
    %215 = vmatpush1.msra.mxu0 0.0
    %216 = vmatprep.subr.mxu0 0.0
    %217 = vmatpush1.msra.mxu0 0.0
    %218 = vmatprep.subr.mxu0 0.0
    %219 = vmatpush1.msra.mxu0 0.0
    %220 = vmatprep.mubr.f32.mxu0 0.0
    %221 = vmatmul.mubr.f32.gmra.mrb[0].mxu0 %v131
    %v222 = vpop.f32.mrb[0].mxu0
    %v223 = vadd.f32 %v154, %v222
    %v224 = vpop.f32.mrb[0].mxu0
    %225 = vmatprep.mubr.f32.mxu0 0.0
    %226 = vmatmul.mubr.f32.gmra.mrb[0].mxu0 %v132
    %v227 = vpop.f32.mrb[0].mxu0
    %v228 = vadd.f32 %v154, %v227
    %v229 = vpop.f32.mrb[0].mxu0
    %230 = vdwg.mxu0
    %231 = vst [vmem:[#allocation5] sm:$0xff] %v223
    %232 = vst [vmem:[#allocation5 + $0x8] sm:$0xff] %v228
    // Predicated region
    $region26: #{tpu_custom_call.1} parent=1 // pred_check
      _
    $region27: #{tpu_custom_call.1} parent=1 // pred_check_branch
      %234 = sbr.rel (0) target = $region29
    $region28: #{tpu_custom_call.1} parent=1 // pred_region
      %s236 = ssub.s32 256, 256
      %237 = vsyncadd [#allocation4], %s236
      %s238 = sshll.u32 [#allocation5], 4
      %s239 = int_to_ptr.vmem [resolvable:$true] %s238
      %244 = dma.vmem_to_hbm [thread:$0]  %s239, 256, %s5, [#allocation4], 128, 128, 8
    $region29: #{tpu_custom_call.1} parent=1 // pred_fallthru
      _
    // Predicated region
    $region30: #{tpu_custom_call.1} parent=1 // pred_check
      _
    $region31: #{tpu_custom_call.1} parent=1 // pred_check_branch
      %246 = sbr.rel (0) target = $region33
    $region32: #{tpu_custom_call.1} parent=1 // pred_region
      %247 = dma.done [#allocation4], 256
    $region33: #{tpu_custom_call.1} parent=1 // pred_fallthru
      _
    %248 = vsyncpa [#allocation3], 1
    %249 = vsyncpa [#allocation4], 1

</llo_original>
